<compile_context>
chip_gen: v7x
topology: tpu7x:2x2x1
jax: 0.10.0
libtpu: 0.0.40
codegen_flags: <defaults>
</compile_context>

<pallas_src>
import functools

import jax
import jax.numpy as jnp
from jax.experimental import pallas as pl
from jax.experimental.pallas import tpu as pltpu


def _pick_row_tile(n):
    # Largest power-of-two tile (multiple of 8 sublanes) that divides N.
    for cand in (2048, 1024, 512, 256, 128, 64, 32, 16, 8):
        if n % cand == 0:
            return cand
    return n  # full extent (valid: equals the array dim)


def _pick_batch_tile(b, tn):
    # Fold a batch sub-tile into the matmul M dim.  Requires TN % 8 == 0 so the
    # in-kernel (TB, TN, D) -> (TB*TN, D) reshape stays sublane-aligned.
    if tn % 8 != 0:
        return 1
    for cand in (8, 4, 2):
        if b % cand == 0 and cand * tn <= 4096:
            return cand
    return 1


def _lsr32(x, k):
    """Logical shift-right on int32 (arithmetic shift + mask)."""
    return (x >> k) & jnp.int32((1 << (32 - k)) - 1)


def _encoder_kernel(
    # scalar prefetch
    seed_ref,                  # (1,) int32 in SMEM
    # inputs
    x_ref,                     # (TB, TN, D)  row/batch tile (streamed)
    eps_ref,                   # (TB, Z)      reparameterization noise
    w1_ref, b1_ref,            # (D, H), (1, H)   pre-scaled by 1/(1-p) if p>0
    w2_ref, b2_ref,            # (H, Z), (1, Z)
    wz_ref, bz_ref,            # (Z, H), (1, H)
    wh_ref, bh_ref,            # (H, 2Z), (1, 2Z)   fused [mu | logsigma]
    # outputs
    z_ref,                     # (TB, Z)
    # scratch
    acc_ref,                   # (TB, Z) f32  running sum of emb over set dim
    *, n_total, tb, tn, z_dim, drop_threshold,
):
    ni = pl.program_id(1)

    @pl.when(ni == 0)
    def _():
        acc_ref[...] = jnp.zeros_like(acc_ref)

    d = x_ref.shape[-1]
    h_dim = w1_ref.shape[1]
    m = tb * tn

    # In-kernel cast (VALU op hidden under DMA/MXU) instead of a wrapper pass.
    x = x_ref[...].reshape(m, d).astype(w1_ref.dtype)
    h = jnp.dot(x, w1_ref[...], preferred_element_type=jnp.float32) + b1_ref[...]

    if drop_threshold > 0:
        # Training-mode dropout.  Keep-mask from a murmur3-fmix32 hash of the
        # global element counter + seed: deterministic per seed, zero HBM
        # traffic, pure int32 VPU ops (works in interpret mode and on TPU).
        # The 1/(1-p) keep-scale is pre-folded into W1/b1 on the host, and
        # relu(dropout(.)) == dropout(relu(.)) since the scale is >= 0.
        # TODO(synk): bitwise parity with torch's dropout RNG is not reproducible.
        step = pl.program_id(0) * pl.num_programs(1) + ni
        rows = jax.lax.broadcasted_iota(jnp.int32, (m, h_dim), 0)
        cols = jax.lax.broadcasted_iota(jnp.int32, (m, h_dim), 1)
        bits = (step * (m * h_dim) + rows * h_dim + cols
                + seed_ref[0] * jnp.int32(-1640531527))        # 0x9E3779B9
        bits = bits ^ _lsr32(bits, 16)
        bits = bits * jnp.int32(-2048144789)                   # 0x85EBCA6B
        bits = bits ^ _lsr32(bits, 13)
        bits = bits * jnp.int32(-1028477387)                   # 0xC2B2AE35
        bits = bits ^ _lsr32(bits, 16)
        u24 = bits & jnp.int32(0xFFFFFF)                       # 24 uniform bits
        keep = u24 >= jnp.int32(drop_threshold)                # P(keep) ~= 1-p
        h = jnp.where(keep, h, 0.0)

    h = jnp.maximum(h, 0.0)                                    # ReLU
    emb = jnp.dot(h.astype(w2_ref.dtype), w2_ref[...],
                  preferred_element_type=jnp.float32) + b2_ref[...]   # (m, Z)

    # Mean over the set dim as a running per-batch sum (XLU sublane reduce).
    for t in range(tb):
        seg = emb[t * tn:(t + 1) * tn, :]                      # (TN, Z)
        acc_ref[pl.ds(t, 1), :] += jnp.sum(seg, axis=0, keepdims=True)

    @pl.when(ni == pl.num_programs(1) - 1)
    def _():
        # Tiny z-head: keep everything f32 (accuracy is free here).
        agg = acc_ref[...] * (1.0 / n_total)                   # (TB, Z)
        hz = jnp.dot(agg, wz_ref[...],
                     preferred_element_type=jnp.float32) + bz_ref[...]
        hz = jnp.maximum(hz, 0.0)
        head = jnp.dot(hz, wh_ref[...],
                       preferred_element_type=jnp.float32) + bh_ref[...]  # (TB, 2Z)
        mu = head[:, :z_dim]
        log_sigma = head[:, z_dim:]
        z_ref[...] = eps_ref[...] * jnp.exp(0.5 * log_sigma) + mu


def neu_process_encoder_forward(x, params, eps, *, seed=0, dropout_p=0.4,
                                matmul_dtype=jnp.float32,
                                row_tile=None, batch_tile=None):
    """x: (B, N, D), eps: (B, Z) f32. Returns z: (B, Z) f32."""
    B, N, D = x.shape
    H = params["w1"].shape[1]
    Z = params["w2"].shape[1]
    # PyTorch module implicitly requires input_size == output_size for
    # z_to_hidden; enforce the same.
    assert params["wz"].shape[0] == Z, "z_to_hidden fan-in must equal aggregate dim"

    TN = row_tile or _pick_row_tile(N)
    assert N % TN == 0
    TB = batch_tile or _pick_batch_tile(B, TN)
    assert B % TB == 0
    if TB > 1:
        assert TN % 8 == 0

    f32 = jnp.float32
    p = float(dropout_p)
    drop_threshold = int(round(p * (1 << 24))) if p > 0.0 else 0
    keep_scale = 1.0 / (1.0 - p) if p > 0.0 else 1.0   # fold only when p > 0

    # Only the tiny, VMEM-resident weights are touched on the host; x streams
    # through the kernel unpadded and uncast.
    w1 = (params["w1"] * keep_scale).astype(matmul_dtype)
    b1 = (params["b1"] * keep_scale).astype(f32)
    w2 = params["w2"].astype(matmul_dtype)
    b2 = params["b2"].astype(f32)
    wz = params["wz"].astype(f32)                      # z-head stays f32
    bz = params["bz"].astype(f32)
    wh = jnp.concatenate([params["wmu"], params["wls"]], axis=1).astype(f32)
    bh = jnp.concatenate([params["bmu"], params["bls"]], axis=1).astype(f32)

    seed_arr = jnp.asarray([seed], dtype=jnp.int32)

    kernel = functools.partial(
        _encoder_kernel, n_total=N, tb=TB, tn=TN, z_dim=Z,
        drop_threshold=drop_threshold)

    grid_spec = pltpu.PrefetchScalarGridSpec(
        num_scalar_prefetch=1,
        grid=(B // TB, N // TN),
        in_specs=[
            pl.BlockSpec((TB, TN, D), lambda b, n, s: (b, n, 0)),   # x (streamed)
            pl.BlockSpec((TB, Z),     lambda b, n, s: (b, 0)),      # eps
            pl.BlockSpec((D, H),      lambda b, n, s: (0, 0)),      # w1 (resident)
            pl.BlockSpec((1, H),      lambda b, n, s: (0, 0)),      # b1
            pl.BlockSpec((H, Z),      lambda b, n, s: (0, 0)),      # w2
            pl.BlockSpec((1, Z),      lambda b, n, s: (0, 0)),      # b2
            pl.BlockSpec((Z, H),      lambda b, n, s: (0, 0)),      # wz
            pl.BlockSpec((1, H),      lambda b, n, s: (0, 0)),      # bz
            pl.BlockSpec((H, 2 * Z),  lambda b, n, s: (0, 0)),      # fused head W
            pl.BlockSpec((1, 2 * Z),  lambda b, n, s: (0, 0)),      # fused head b
        ],
        out_specs=pl.BlockSpec((TB, Z), lambda b, n, s: (b, 0)),
        scratch_shapes=[pltpu.VMEM((TB, Z), jnp.float32)],
    )

    weight_bytes = sum(int(a.size) * a.dtype.itemsize
                       for a in (w1, b1, w2, b2, wz, bz, wh, bh))
    cost = pl.CostEstimate(
        flops=2 * B * N * (D * H + H * Z) + 2 * B * (Z * H + H * 2 * Z),
        transcendentals=B * Z,
        bytes_accessed=(int(x.size) * x.dtype.itemsize
                        + int(eps.size) * 4 + weight_bytes + B * Z * 4),
    )

    return pl.pallas_call(
        kernel,
        out_shape=jax.ShapeDtypeStruct((B, Z), jnp.float32),
        grid_spec=grid_spec,
        compiler_params=pltpu.CompilerParams(
            # Batch axis shards across TensorCores (v7x megacore); the set axis
            # reduces into the VMEM accumulator so it must stay "arbitrary".
            dimension_semantics=("parallel", "arbitrary"),
        ),
        cost_estimate=cost,
    )(seed_arr, x, eps.astype(f32), w1, b1, w2, b2, wz, bz, wh, bh)


def _init_linear(key, fan_in, fan_out):
    """PyTorch-style uniform(-1/sqrt(fan_in), 1/sqrt(fan_in)); weight stored (in, out)."""
    kw, kb = jax.random.split(key)
    bound = 1.0 / (fan_in ** 0.5)
    w = jax.random.uniform(kw, (fan_in, fan_out), jnp.float32, -bound, bound)
    b = jax.random.uniform(kb, (1, fan_out), jnp.float32, -bound, bound)
    return w, b


def make_params(key, input_size=64, hidden_size=64, output_size=64):
    # NOTE: the PyTorch module declares z_to_hidden = Linear(input_size, hidden)
    # but feeds it the aggregate (output_size wide); that only works when
    # input_size == output_size, which we require here too.
    assert input_size == output_size
    ks = jax.random.split(key, 5)
    w1, b1 = _init_linear(ks[0], input_size, hidden_size)      # input_to_hidden[0]
    w2, b2 = _init_linear(ks[1], hidden_size, output_size)     # input_to_hidden[3]
    wz, bz = _init_linear(ks[2], input_size, hidden_size)      # z_to_hidden
    wmu, bmu = _init_linear(ks[3], hidden_size, output_size)   # hidden_to_mu
    wls, bls = _init_linear(ks[4], hidden_size, output_size)   # hidden_to_logsigma
    return dict(w1=w1, b1=b1, w2=w2, b2=b2, wz=wz, bz=bz,
                wmu=wmu, bmu=bmu, wls=wls, bls=bls)


def _reference_no_dropout(x, params, eps):
    """Pure-JAX reference of the same forward with dropout disabled."""
    B, N, D = x.shape
    h = x.reshape(B * N, D) @ params["w1"] + params["b1"]
    h = jnp.maximum(h, 0.0)
    emb = (h @ params["w2"] + params["b2"]).reshape(B, N, -1)
    agg = jnp.mean(emb, axis=-2)
    hz = jnp.maximum(agg @ params["wz"] + params["bz"], 0.0)
    mu = hz @ params["wmu"] + params["bmu"]
    ls = hz @ params["wls"] + params["bls"]
    return eps * jnp.exp(0.5 * ls) + mu


if __name__ == "__main__":
    B, N = 2, 8                           # batch, context-set size
    INPUT = HIDDEN = OUTPUT = 64          # module defaults (kept small)
    DROPOUT_P = 0.4

    root = jax.random.PRNGKey(0)
    k_x, k_params, k_eps = jax.random.split(root, 3)

    x = jax.random.normal(k_x, (B, N, INPUT), jnp.float32)
    params = make_params(k_params, INPUT, HIDDEN, OUTPUT)
    # torch.randn_like(std) equivalent, drawn deterministically host-side.
    eps = jax.random.normal(k_eps, (B, OUTPUT), jnp.float32)

    # 1) Dropout disabled -> check against the pure-JAX reference (f32).
    z_eval = jax.block_until_ready(
        neu_process_encoder_forward(x, params, eps, seed=0, dropout_p=0.0))
    z_ref = _reference_no_dropout(x, params, eps)
    assert z_eval.shape == (B, OUTPUT)
    assert bool(jnp.all(jnp.isfinite(z_eval)))
    assert bool(jnp.allclose(z_eval, z_ref, atol=1e-3, rtol=1e-3))

    # 2) bf16 operands for the streamed matmuls (f32 accumulate, f32 z-head).
    z_bf16 = jax.block_until_ready(
        neu_process_encoder_forward(x, params, eps, seed=0, dropout_p=0.0,
                                    matmul_dtype=jnp.bfloat16))
    assert bool(jnp.allclose(z_bf16, z_ref, atol=1e-1, rtol=1e-1))

    # 3) Training-mode dropout from the in-kernel hash PRNG: deterministic per
    #    seed, finite, correct shape.
    z_d1 = jax.block_until_ready(
        neu_process_encoder_forward(x, params, eps, seed=123, dropout_p=DROPOUT_P))
    z_d2 = jax.block_until_ready(
        neu_process_encoder_forward(x, params, eps, seed=123, dropout_p=DROPOUT_P))
    assert z_d1.shape == (B, OUTPUT)
    assert bool(jnp.all(jnp.isfinite(z_d1)))
    assert bool(jnp.array_equal(z_d1, z_d2))

    print("KERNEL_OK")
</pallas_src>

<mosaic_0001>
module attributes {stable_mosaic.version = 11 : i64} {
  func.func @_encoder_kernel(%arg0: i32, %arg1: i32, %arg2: memref<1xi32, #tpu.memory_space<smem>>, %arg3: memref<2x8x64xf32, #tpu.memory_space<vmem>>, %arg4: memref<2x64xf32, #tpu.memory_space<vmem>>, %arg5: memref<64x64xf32, #tpu.memory_space<vmem>>, %arg6: memref<1x64xf32, #tpu.memory_space<vmem>>, %arg7: memref<64x64xf32, #tpu.memory_space<vmem>>, %arg8: memref<1x64xf32, #tpu.memory_space<vmem>>, %arg9: memref<64x64xf32, #tpu.memory_space<vmem>>, %arg10: memref<1x64xf32, #tpu.memory_space<vmem>>, %arg11: memref<64x128xf32, #tpu.memory_space<vmem>>, %arg12: memref<1x128xf32, #tpu.memory_space<vmem>>, %arg13: memref<2x64xf32, #tpu.memory_space<vmem>>, %arg14: memref<2x64xf32, #tpu.memory_space<vmem>>) attributes {dimension_semantics = [#tpu.dimension_semantics<parallel>, #tpu.dimension_semantics<arbitrary>], iteration_bounds = array<i64: 1, 1>, scalar_prefetch = 1 : i64, scratch_operands = 1 : i64, tpu.core_type = #tpu.core_type<tc>, window_params = [{transform_indices = @transform_0, window_bounds = array<i64: 2, 8, 64>}, {transform_indices = @transform_1, window_bounds = array<i64: 2, 64>}, {pipeline_mode = #tpu.pipeline_mode<synchronous>, transform_indices = @transform_2, window_bounds = array<i64: 64, 64>}, {pipeline_mode = #tpu.pipeline_mode<synchronous>, transform_indices = @transform_3, window_bounds = array<i64: 1, 64>}, {pipeline_mode = #tpu.pipeline_mode<synchronous>, transform_indices = @transform_4, window_bounds = array<i64: 64, 64>}, {pipeline_mode = #tpu.pipeline_mode<synchronous>, transform_indices = @transform_5, window_bounds = array<i64: 1, 64>}, {pipeline_mode = #tpu.pipeline_mode<synchronous>, transform_indices = @transform_6, window_bounds = array<i64: 64, 64>}, {pipeline_mode = #tpu.pipeline_mode<synchronous>, transform_indices = @transform_7, window_bounds = array<i64: 1, 64>}, {pipeline_mode = #tpu.pipeline_mode<synchronous>, transform_indices = @transform_8, window_bounds = array<i64: 64, 128>}, {pipeline_mode = #tpu.pipeline_mode<synchronous>, transform_indices = @transform_9, window_bounds = array<i64: 1, 128>}, {transform_indices = @transform_10, window_bounds = array<i64: 2, 64>}]} {
    %c0_i32 = arith.constant 0 : i32
    %0 = arith.cmpi eq, %arg1, %c0_i32 : i32
    %1 = arith.extui %0 : i1 to i32
    %c0_i32_0 = arith.constant 0 : i32
    %2 = arith.cmpi ne, %1, %c0_i32_0 : i32
    scf.if %2 {
      %cst_24 = arith.constant 0.000000e+00 : f32
      %32 = vector.broadcast %cst_24 : f32 to vector<2x64xf32>
      %c0_25 = arith.constant 0 : index
      %c0_26 = arith.constant 0 : index
      %33 = vector.load %arg14[%c0_25, %c0_26] : memref<2x64xf32, #tpu.memory_space<vmem>>, vector<2x64xf32>
      tpu.vector_store %arg14[%c0_25, %c0_26], %32 {strides = array<i32>} : memref<2x64xf32, #tpu.memory_space<vmem>>, vector<2x64xf32>,
    } else {
    }
    %c0 = arith.constant 0 : index
    %c0_1 = arith.constant 0 : index
    %c0_2 = arith.constant 0 : index
    %3 = vector.load %arg3[%c0, %c0_1, %c0_2] : memref<2x8x64xf32, #tpu.memory_space<vmem>>, vector<2x8x64xf32>
    %4 = vector.shape_cast %3 : vector<2x8x64xf32> to vector<16x64xf32>
    %c0_3 = arith.constant 0 : index
    %c0_4 = arith.constant 0 : index
    %5 = vector.load %arg5[%c0_3, %c0_4] : memref<64x64xf32, #tpu.memory_space<vmem>>, vector<64x64xf32>
    %cst = arith.constant dense<0.000000e+00> : vector<16x64xf32>
    %6 = tpu.matmul %4, %5, %cst {dimension_numbers = #tpu.dot_dimension_numbers<[1], [0], [0], [1], [0, 0, 1, 1], [], []>} : vector<16x64xf32>, vector<64x64xf32>, vector<16x64xf32> -> vector<16x64xf32>
    %c0_5 = arith.constant 0 : index
    %c0_6 = arith.constant 0 : index
    %7 = vector.load %arg6[%c0_5, %c0_6] : memref<1x64xf32, #tpu.memory_space<vmem>>, vector<1x64xf32>
    %8 = vector.broadcast %7 : vector<1x64xf32> to vector<16x64xf32>
    %9 = arith.addf %6, %8 : vector<16x64xf32>
    %cst_7 = arith.constant 0.000000e+00 : f32
    %10 = vector.broadcast %cst_7 : f32 to vector<16x64xf32>
    %11 = arith.maximumf %9, %10 : vector<16x64xf32>
    %c0_8 = arith.constant 0 : index
    %c0_9 = arith.constant 0 : index
    %12 = vector.load %arg7[%c0_8, %c0_9] : memref<64x64xf32, #tpu.memory_space<vmem>>, vector<64x64xf32>
    %cst_10 = arith.constant dense<0.000000e+00> : vector<16x64xf32>
    %13 = tpu.matmul %11, %12, %cst_10 {dimension_numbers = #tpu.dot_dimension_numbers<[1], [0], [0], [1], [0, 0, 1, 1], [], []>} : vector<16x64xf32>, vector<64x64xf32>, vector<16x64xf32> -> vector<16x64xf32>
    %c0_11 = arith.constant 0 : index
    %c0_12 = arith.constant 0 : index
    %14 = vector.load %arg8[%c0_11, %c0_12] : memref<1x64xf32, #tpu.memory_space<vmem>>, vector<1x64xf32>
    %15 = vector.broadcast %14 : vector<1x64xf32> to vector<16x64xf32>
    %16 = arith.addf %13, %15 : vector<16x64xf32>
    %17 = vector.extract_strided_slice %16 {offsets = [0, 0], sizes = [8, 64], strides = [1, 1]} : vector<16x64xf32> to vector<8x64xf32>
    %c0_13 = arith.constant 0 : index
    %c0_14 = arith.constant 0 : index
    %18 = vector.load %arg14[%c0_13, %c0_14] : memref<2x64xf32, #tpu.memory_space<vmem>>, vector<1x64xf32>
    %cst_15 = arith.constant dense<0.000000e+00> : vector<64xf32>
    %19 = vector.multi_reduction <add>, %17, %cst_15 [0] : vector<8x64xf32> to vector<64xf32>
    %20 = vector.shape_cast %19 : vector<64xf32> to vector<1x64xf32>
    %21 = arith.addf %18, %20 : vector<1x64xf32>
    %c0_16 = arith.constant 0 : index
    %c0_17 = arith.constant 0 : index
    %22 = vector.load %arg14[%c0_16, %c0_17] : memref<2x64xf32, #tpu.memory_space<vmem>>, vector<1x64xf32>
    tpu.vector_store %arg14[%c0_16, %c0_17], %21 {strides = array<i32>} : memref<2x64xf32, #tpu.memory_space<vmem>>, vector<1x64xf32>,
    %23 = vector.extract_strided_slice %16 {offsets = [8, 0], sizes = [8, 64], strides = [1, 1]} : vector<16x64xf32> to vector<8x64xf32>
    %c1 = arith.constant 1 : index
    %c0_18 = arith.constant 0 : index
    %24 = vector.load %arg14[%c1, %c0_18] : memref<2x64xf32, #tpu.memory_space<vmem>>, vector<1x64xf32>
    %cst_19 = arith.constant dense<0.000000e+00> : vector<64xf32>
    %25 = vector.multi_reduction <add>, %23, %cst_19 [0] : vector<8x64xf32> to vector<64xf32>
    %26 = vector.shape_cast %25 : vector<64xf32> to vector<1x64xf32>
    %27 = arith.addf %24, %26 : vector<1x64xf32>
    %c1_20 = arith.constant 1 : index
    %c0_21 = arith.constant 0 : index
    %28 = vector.load %arg14[%c1_20, %c0_21] : memref<2x64xf32, #tpu.memory_space<vmem>>, vector<1x64xf32>
    tpu.vector_store %arg14[%c1_20, %c0_21], %27 {strides = array<i32>} : memref<2x64xf32, #tpu.memory_space<vmem>>, vector<1x64xf32>,
    %c0_i32_22 = arith.constant 0 : i32
    %29 = arith.cmpi eq, %arg1, %c0_i32_22 : i32
    %30 = arith.extui %29 : i1 to i32
    %c0_i32_23 = arith.constant 0 : i32
    %31 = arith.cmpi ne, %30, %c0_i32_23 : i32
    scf.if %31 {
      %c0_24 = arith.constant 0 : index
      %c0_25 = arith.constant 0 : index
      %32 = vector.load %arg14[%c0_24, %c0_25] : memref<2x64xf32, #tpu.memory_space<vmem>>, vector<2x64xf32>
      %cst_26 = arith.constant 1.250000e-01 : f32
      %33 = vector.broadcast %cst_26 : f32 to vector<2x64xf32>
      %34 = arith.mulf %32, %33 : vector<2x64xf32>
      %c0_27 = arith.constant 0 : index
      %c0_28 = arith.constant 0 : index
      %35 = vector.load %arg9[%c0_27, %c0_28] : memref<64x64xf32, #tpu.memory_space<vmem>>, vector<64x64xf32>
      %cst_29 = arith.constant dense<0.000000e+00> : vector<2x64xf32>
      %36 = tpu.matmul %34, %35, %cst_29 {dimension_numbers = #tpu.dot_dimension_numbers<[1], [0], [0], [1], [0, 0, 1, 1], [], []>} : vector<2x64xf32>, vector<64x64xf32>, vector<2x64xf32> -> vector<2x64xf32>
      %c0_30 = arith.constant 0 : index
      %c0_31 = arith.constant 0 : index
      %37 = vector.load %arg10[%c0_30, %c0_31] : memref<1x64xf32, #tpu.memory_space<vmem>>, vector<1x64xf32>
      %38 = vector.broadcast %37 : vector<1x64xf32> to vector<2x64xf32>
      %39 = arith.addf %36, %38 : vector<2x64xf32>
      %cst_32 = arith.constant 0.000000e+00 : f32
      %40 = vector.broadcast %cst_32 : f32 to vector<2x64xf32>
      %41 = arith.maximumf %39, %40 : vector<2x64xf32>
      %c0_33 = arith.constant 0 : index
      %c0_34 = arith.constant 0 : index
      %42 = vector.load %arg11[%c0_33, %c0_34] : memref<64x128xf32, #tpu.memory_space<vmem>>, vector<64x128xf32>
      %cst_35 = arith.constant dense<0.000000e+00> : vector<2x128xf32>
      %43 = tpu.matmul %41, %42, %cst_35 {dimension_numbers = #tpu.dot_dimension_numbers<[1], [0], [0], [1], [0, 0, 1, 1], [], []>} : vector<2x64xf32>, vector<64x128xf32>, vector<2x128xf32> -> vector<2x128xf32>
      %c0_36 = arith.constant 0 : index
      %c0_37 = arith.constant 0 : index
      %44 = vector.load %arg12[%c0_36, %c0_37] : memref<1x128xf32, #tpu.memory_space<vmem>>, vector<1x128xf32>
      %45 = vector.broadcast %44 : vector<1x128xf32> to vector<2x128xf32>
      %46 = arith.addf %43, %45 : vector<2x128xf32>
      %47 = vector.extract_strided_slice %46 {offsets = [0, 0], sizes = [2, 64], strides = [1, 1]} : vector<2x128xf32> to vector<2x64xf32>
      %48 = vector.extract_strided_slice %46 {offsets = [0, 64], sizes = [2, 64], strides = [1, 1]} : vector<2x128xf32> to vector<2x64xf32>
      %c0_38 = arith.constant 0 : index
      %c0_39 = arith.constant 0 : index
      %49 = vector.load %arg4[%c0_38, %c0_39] : memref<2x64xf32, #tpu.memory_space<vmem>>, vector<2x64xf32>
      %cst_40 = arith.constant 5.000000e-01 : f32
      %50 = vector.broadcast %cst_40 : f32 to vector<2x64xf32>
      %51 = arith.mulf %50, %48 : vector<2x64xf32>
      %52 = math.exp %51 : vector<2x64xf32>
      %53 = arith.mulf %49, %52 : vector<2x64xf32>
      %54 = arith.addf %53, %47 : vector<2x64xf32>
      %c0_41 = arith.constant 0 : index
      %c0_42 = arith.constant 0 : index
      %55 = vector.load %arg13[%c0_41, %c0_42] : memref<2x64xf32, #tpu.memory_space<vmem>>, vector<2x64xf32>
      tpu.vector_store %arg13[%c0_41, %c0_42], %54 {strides = array<i32>} : memref<2x64xf32, #tpu.memory_space<vmem>>, vector<2x64xf32>,
    } else {
    }
    return
  }
  func.func @transform_0(%arg0: i32, %arg1: i32, %arg2: memref<1xi32, #tpu.memory_space<smem>>) -> (i32, i32, i32) {
    %c0_i32 = arith.constant 0 : i32
    %c0_i32_0 = arith.constant 0 : i32
    return %arg0, %arg1, %c0_i32 : i32, i32, i32
  }
  func.func @transform_1(%arg0: i32, %arg1: i32, %arg2: memref<1xi32, #tpu.memory_space<smem>>) -> (i32, i32) {
    %c0_i32 = arith.constant 0 : i32
    %c0_i32_0 = arith.constant 0 : i32
    return %arg0, %c0_i32 : i32, i32
  }
  func.func @transform_2(%arg0: i32, %arg1: i32, %arg2: memref<1xi32, #tpu.memory_space<smem>>) -> (i32, i32) {
    %c0_i32 = arith.constant 0 : i32
    %c0_i32_0 = arith.constant 0 : i32
    %c0_i32_1 = arith.constant 0 : i32
    return %c0_i32, %c0_i32_0 : i32, i32
  }
  func.func @transform_3(%arg0: i32, %arg1: i32, %arg2: memref<1xi32, #tpu.memory_space<smem>>) -> (i32, i32) {
    %c0_i32 = arith.constant 0 : i32
    %c0_i32_0 = arith.constant 0 : i32
    %c0_i32_1 = arith.constant 0 : i32
    return %c0_i32, %c0_i32_0 : i32, i32
  }
  func.func @transform_4(%arg0: i32, %arg1: i32, %arg2: memref<1xi32, #tpu.memory_space<smem>>) -> (i32, i32) {
    %c0_i32 = arith.constant 0 : i32
    %c0_i32_0 = arith.constant 0 : i32
    %c0_i32_1 = arith.constant 0 : i32
    return %c0_i32, %c0_i32_0 : i32, i32
  }
  func.func @transform_5(%arg0: i32, %arg1: i32, %arg2: memref<1xi32, #tpu.memory_space<smem>>) -> (i32, i32) {
    %c0_i32 = arith.constant 0 : i32
    %c0_i32_0 = arith.constant 0 : i32
    %c0_i32_1 = arith.constant 0 : i32
    return %c0_i32, %c0_i32_0 : i32, i32
  }
  func.func @transform_6(%arg0: i32, %arg1: i32, %arg2: memref<1xi32, #tpu.memory_space<smem>>) -> (i32, i32) {
    %c0_i32 = arith.constant 0 : i32
    %c0_i32_0 = arith.constant 0 : i32
    %c0_i32_1 = arith.constant 0 : i32
    return %c0_i32, %c0_i32_0 : i32, i32
  }
  func.func @transform_7(%arg0: i32, %arg1: i32, %arg2: memref<1xi32, #tpu.memory_space<smem>>) -> (i32, i32) {
    %c0_i32 = arith.constant 0 : i32
    %c0_i32_0 = arith.constant 0 : i32
    %c0_i32_1 = arith.constant 0 : i32
    return %c0_i32, %c0_i32_0 : i32, i32
  }
  func.func @transform_8(%arg0: i32, %arg1: i32, %arg2: memref<1xi32, #tpu.memory_space<smem>>) -> (i32, i32) {
    %c0_i32 = arith.constant 0 : i32
    %c0_i32_0 = arith.constant 0 : i32
    %c0_i32_1 = arith.constant 0 : i32
    return %c0_i32, %c0_i32_0 : i32, i32
  }
  func.func @transform_9(%arg0: i32, %arg1: i32, %arg2: memref<1xi32, #tpu.memory_space<smem>>) -> (i32, i32) {
    %c0_i32 = arith.constant 0 : i32
    %c0_i32_0 = arith.constant 0 : i32
    %c0_i32_1 = arith.constant 0 : i32
    return %c0_i32, %c0_i32_0 : i32, i32
  }
  func.func @transform_10(%arg0: i32, %arg1: i32, %arg2: memref<1xi32, #tpu.memory_space<smem>>) -> (i32, i32) {
    %c0_i32 = arith.constant 0 : i32
    %c0_i32_0 = arith.constant 0 : i32
    return %arg0, %c0_i32 : i32, i32
  }
}

</mosaic_0001>

<llo_original>
// kernel: tpu_custom_call.1
$region0: #{tpu_custom_call.1}
  #allocation0 [shape = 'u32[]', space=smem, size = 0x4, offset = 0x4, fixed_abs, tag = 'smem constant byte address 0x4 - core index']
  #allocation1 [shape = 'u32[144,128]{1,0:T(1,128)}', space=vmem, size = 0x12000, scoped, tag = 'internal scratch']
  #allocation2 [shape = 'f32[2,64]{1,0:T(2,128)}', space=vmem, size = 0x400, scoped, tag = 'scratch operand']
  #allocation3 [shape = 's32[1]{0}', space=sflag, size = 0x4, scoped, tag = 'scoped memory for tpu_custom_call.1']
  #allocation4 [shape = 's32[1]{0:T(128)S(6)}', space=smem, size = 0x200, scoped, tag = 'prefetched SMEM operand 0']
  %s0 = inlined_call_operand.<no memory space> [shape: s32[1], index: 0, kind: input, shape index: {}]
  %s1 = inlined_call_operand.hbm [shape: f32[2,8,64], index: 1, kind: input, shape index: {}]
  %s2 = inlined_call_operand.vmem [shape: f32[2,64], index: 2, kind: input, shape index: {}]
  %s3 = inlined_call_operand.hbm [shape: f32[64,64], index: 3, kind: input, shape index: {}]
  %s4 = inlined_call_operand.vmem [shape: f32[1,64], index: 4, kind: input, shape index: {}]
  %s5 = inlined_call_operand.hbm [shape: f32[64,64], index: 5, kind: input, shape index: {}]
  %s6 = inlined_call_operand.vmem [shape: f32[1,64], index: 6, kind: input, shape index: {}]
  %s7 = inlined_call_operand.hbm [shape: f32[64,64], index: 7, kind: input, shape index: {}]
  %s8 = inlined_call_operand.vmem [shape: f32[1,64], index: 8, kind: input, shape index: {}]
  %s9 = inlined_call_operand.hbm [shape: f32[64,128], index: 9, kind: input, shape index: {}]
  %s10 = inlined_call_operand.vmem [shape: f32[1,128], index: 10, kind: input, shape index: {}]
  %s11 = inlined_call_operand.hbm [shape: f32[2,64], index: 11, kind: output, shape index: {}]
  %s12 = sld [smem:[#allocation0]]
  $region78: #{tpu_custom_call.1} parent=0
    _
  %s14 = ssub.s32 1, %s12
  %s15 = scalar_select 0, %s14, %s12
  %16 = sst [smem:[#allocation4]] %s0
  $region1: #{tpu_custom_call.1} parent=0
    #allocation5 [shape = 'u8[8192]{0}', space=vmem, size = 0x2000, scoped, tag = 'input window, operand 1, single buffered']
    #allocation6 [shape = 's32[1]{0}', space=sflag, size = 0x4, scoped, tag = 'scoped memory for tpu_custom_call.1']
    #allocation7 [shape = 's32[1]{0}', space=sflag, size = 0x4, scoped, tag = 'scoped memory for tpu_custom_call.1']
    #allocation8 [shape = 'u8[32768]{0}', space=vmem, size = 0x8000, scoped, tag = 'input window, operand 3, single buffered']
    #allocation9 [shape = 's32[1]{0}', space=sflag, size = 0x4, scoped, tag = 'scoped memory for tpu_custom_call.1']
    #allocation10 [shape = 'u8[32768]{0}', space=vmem, size = 0x8000, scoped, tag = 'input window, operand 5, single buffered']
    #allocation11 [shape = 'u8[32768]{0}', space=vmem, size = 0x8000, scoped, tag = 'input window, operand 7, single buffered']
    #allocation12 [shape = 's32[1]{0}', space=sflag, size = 0x4, scoped, tag = 'scoped memory for tpu_custom_call.1']
    #allocation13 [shape = 'u8[32768]{0}', space=vmem, size = 0x8000, scoped, tag = 'input window, operand 9, single buffered']
    #allocation14 [shape = 'u8[1024]{0}', space=vmem, size = 0x400, scoped, tag = 'output window, operand 0, single buffered']
    %17 = vsyncpa [#allocation6], 0
    %18 = vsyncpa [#allocation9], 0
    %19 = vsyncpa [#allocation12], 0
    %20 = vsyncpa [#allocation7], 0
    // Predicated region
    $region2: #{tpu_custom_call.1} parent=1 // pred_check
      _
    $region3: #{tpu_custom_call.1} parent=1 // pred_check_branch
      %22 = sbr.rel (0) target = $region5
    $region4: #{tpu_custom_call.1} parent=1 // pred_region
      %s24 = ssub.s32 256, 256
      %25 = vsyncadd [#allocation6], %s24
      %s26 = sshll.u32 [#allocation5], 4
      %s27 = int_to_ptr.vmem [resolvable:$true] %s26
      %32 = dma.hbm_to_vmem [thread:$0]  %s1, 256, %s27, [#allocation6], 128, 128, 8
    $region5: #{tpu_custom_call.1} parent=1 // pred_fallthru
      _
    // Predicated region
    $region6: #{tpu_custom_call.1} parent=1 // pred_check
      _
    $region7: #{tpu_custom_call.1} parent=1 // pred_check_branch
      %34 = sbr.rel (0) target = $region9
    $region8: #{tpu_custom_call.1} parent=1 // pred_region
      _
    $region9: #{tpu_custom_call.1} parent=1 // pred_fallthru
      _
    // Predicated region
    $region10: #{tpu_custom_call.1} parent=1 // pred_check
      _
    $region11: #{tpu_custom_call.1} parent=1 // pred_check_branch
      %36 = sbr.rel (0) target = $region13
    $region12: #{tpu_custom_call.1} parent=1 // pred_region
      %s38 = ssub.s32 1024, 1024
      %39 = vsyncadd [#allocation9], %s38
      %s40 = sshll.u32 [#allocation8], 4
      %s41 = int_to_ptr.vmem [resolvable:$true] %s40
      %46 = dma.hbm_to_vmem [thread:$0]  %s3, 1024, %s41, [#allocation9], 128, 128, 8
    $region13: #{tpu_custom_call.1} parent=1 // pred_fallthru
      _
    // Predicated region
    $region14: #{tpu_custom_call.1} parent=1 // pred_check
      _
    $region15: #{tpu_custom_call.1} parent=1 // pred_check_branch
      %48 = sbr.rel (0) target = $region17
    $region16: #{tpu_custom_call.1} parent=1 // pred_region
      _
    $region17: #{tpu_custom_call.1} parent=1 // pred_fallthru
      _
    // Predicated region
    $region18: #{tpu_custom_call.1} parent=1 // pred_check
      _
    $region19: #{tpu_custom_call.1} parent=1 // pred_check_branch
      %50 = sbr.rel (0) target = $region21
    $region20: #{tpu_custom_call.1} parent=1 // pred_region
      %s52 = ssub.s32 1024, 1024
      %53 = vsyncadd [#allocation9], %s52
      %s54 = sshll.u32 [#allocation10], 4
      %s55 = int_to_ptr.vmem [resolvable:$true] %s54
      %60 = dma.hbm_to_vmem [thread:$0]  %s5, 1024, %s55, [#allocation9], 128, 128, 8
    $region21: #{tpu_custom_call.1} parent=1 // pred_fallthru
      _
    // Predicated region
    $region22: #{tpu_custom_call.1} parent=1 // pred_check
      _
    $region23: #{tpu_custom_call.1} parent=1 // pred_check_branch
      %62 = sbr.rel (0) target = $region25
    $region24: #{tpu_custom_call.1} parent=1 // pred_region
      _
    $region25: #{tpu_custom_call.1} parent=1 // pred_fallthru
      _
    // Predicated region
    $region26: #{tpu_custom_call.1} parent=1 // pred_check
      _
    $region27: #{tpu_custom_call.1} parent=1 // pred_check_branch
      %64 = sbr.rel (0) target = $region29
    $region28: #{tpu_custom_call.1} parent=1 // pred_region
      %s66 = ssub.s32 1024, 1024
      %67 = vsyncadd [#allocation12], %s66
      %s68 = sshll.u32 [#allocation11], 4
      %s69 = int_to_ptr.vmem [resolvable:$true] %s68
      %74 = dma.hbm_to_vmem [thread:$0]  %s7, 1024, %s69, [#allocation12], 128, 128, 8
    $region29: #{tpu_custom_call.1} parent=1 // pred_fallthru
      _
    // Predicated region
    $region30: #{tpu_custom_call.1} parent=1 // pred_check
      _
    $region31: #{tpu_custom_call.1} parent=1 // pred_check_branch
      %76 = sbr.rel (0) target = $region33
    $region32: #{tpu_custom_call.1} parent=1 // pred_region
      _
    $region33: #{tpu_custom_call.1} parent=1 // pred_fallthru
      _
    // Predicated region
    $region34: #{tpu_custom_call.1} parent=1 // pred_check
      _
    $region35: #{tpu_custom_call.1} parent=1 // pred_check_branch
      %78 = sbr.rel (0) target = $region37
    $region36: #{tpu_custom_call.1} parent=1 // pred_region
      %s80 = ssub.s32 1024, 1024
      %81 = vsyncadd [#allocation12], %s80
      %s82 = sshll.u32 [#allocation13], 4
      %s83 = int_to_ptr.vmem [resolvable:$true] %s82
      %88 = dma.hbm_to_vmem [thread:$0]  %s9, 1024, %s83, [#allocation12], 128, 128, 8
    $region37: #{tpu_custom_call.1} parent=1 // pred_fallthru
      _
    // Predicated region
    $region38: #{tpu_custom_call.1} parent=1 // pred_check
      _
    $region39: #{tpu_custom_call.1} parent=1 // pred_check_branch
      %90 = sbr.rel (0) target = $region41
    $region40: #{tpu_custom_call.1} parent=1 // pred_region
      _
    $region41: #{tpu_custom_call.1} parent=1 // pred_fallthru
      _
    // Predicated region
    $region42: #{tpu_custom_call.1} parent=1 // pred_check
      _
    $region43: #{tpu_custom_call.1} parent=1 // pred_check_branch
      %92 = sbr.rel (0) target = $region45
    $region44: #{tpu_custom_call.1} parent=1 // pred_region
      %93 = dma.done [#allocation6], 256
    $region45: #{tpu_custom_call.1} parent=1 // pred_fallthru
      _
    // Predicated region
    $region46: #{tpu_custom_call.1} parent=1 // pred_check
      _
    $region47: #{tpu_custom_call.1} parent=1 // pred_check_branch
      %95 = sbr.rel (0) target = $region49
    $region48: #{tpu_custom_call.1} parent=1 // pred_region
      %96 = dma.done [#allocation9], 1024
    $region49: #{tpu_custom_call.1} parent=1 // pred_fallthru
      _
    // Predicated region
    $region50: #{tpu_custom_call.1} parent=1 // pred_check
      _
    $region51: #{tpu_custom_call.1} parent=1 // pred_check_branch
      %98 = sbr.rel (0) target = $region53
    $region52: #{tpu_custom_call.1} parent=1 // pred_region
      %99 = dma.done [#allocation9], 1024
    $region53: #{tpu_custom_call.1} parent=1 // pred_fallthru
      _
    // Predicated region
    $region54: #{tpu_custom_call.1} parent=1 // pred_check
      _
    $region55: #{tpu_custom_call.1} parent=1 // pred_check_branch
      %101 = sbr.rel (0) target = $region57
    $region56: #{tpu_custom_call.1} parent=1 // pred_region
      %102 = dma.done [#allocation12], 1024
    $region57: #{tpu_custom_call.1} parent=1 // pred_fallthru
      _
    // Predicated region
    $region58: #{tpu_custom_call.1} parent=1 // pred_check
      _
    $region59: #{tpu_custom_call.1} parent=1 // pred_check_branch
      %104 = sbr.rel (0) target = $region61
    $region60: #{tpu_custom_call.1} parent=1 // pred_region
      %105 = dma.done [#allocation12], 1024
    $region61: #{tpu_custom_call.1} parent=1 // pred_fallthru
      _
    %p106 = scmp.eq.s32.totalorder 0, 0
    // Predicated region
    $region62: #{tpu_custom_call.1} parent=1 // pred_check
      %p107 = pneg %p106
    $region63: #{tpu_custom_call.1} parent=1 // pred_check_branch
      %109 = sbr.rel (%p107) target = $region65
    $region64: #{tpu_custom_call.1} parent=1 // pred_region
      %vm110 = vcmask 517120
      %111 = vst.msk [vmem:[#allocation2] sm:$0x3] %vm110, 0.0
    $region65: #{tpu_custom_call.1} parent=1 // pred_fallthru
      _
    %v112 = vld [vmem:[#allocation5] sm:$0xff]
    %v113 = vld [vmem:[#allocation5 + $0x8] sm:$0xff]
    %v114 = vld [vmem:[#allocation8] sm:$0xff]
    %v115 = vld [vmem:[#allocation8 + $0x8] sm:$0xff]
    %v116 = vld [vmem:[#allocation8 + $0x10] sm:$0xff]
    %v117 = vld [vmem:[#allocation8 + $0x18] sm:$0xff]
    %v118 = vld [vmem:[#allocation8 + $0x20] sm:$0xff]
    %v119 = vld [vmem:[#allocation8 + $0x28] sm:$0xff]
    %v120 = vld [vmem:[#allocation8 + $0x30] sm:$0xff]
    %v121 = vld [vmem:[#allocation8 + $0x38] sm:$0xff]
    %v122 = vld [vmem:[%s4] sm:$0x1]
    %v124 = vlaneseq
    %v125 = vshrl.u32 %v124, 7
    %v126 = vsub.s32 0, %v125
    %v127 = vrot.slane %v122, %v126
    %vm129 = vcmask 523264
    %v131 = vsel %vm129, %v112, 0
    %v134 = vsel %vm129, %v113, 0
    %136 = vmatprep.subr.mxu0 0.0
    %137 = vmatpush1.msra.mxu0 %v114
    %138 = vmatprep.subr.mxu0 0.0
    %139 = vmatpush1.msra.mxu0 %v115
    %140 = vmatprep.subr.mxu0 0.0
    %141 = vmatpush1.msra.mxu0 %v116
    %142 = vmatprep.subr.mxu0 0.0
    %143 = vmatpush1.msra.mxu0 %v117
    %144 = vmatprep.subr.mxu0 0.0
    %145 = vmatpush1.msra.mxu0 %v118
    %146 = vmatprep.subr.mxu0 0.0
    %147 = vmatpush1.msra.mxu0 %v119
    %148 = vmatprep.subr.mxu0 0.0
    %149 = vmatpush1.msra.mxu0 %v120
    %150 = vmatprep.subr.mxu0 0.0
    %151 = vmatpush1.msra.mxu0 %v121
    %152 = vmatprep.subr.mxu0 0.0
    %153 = vmatpush1.msra.mxu0 0.0
    %154 = vmatprep.subr.mxu0 0.0
    %155 = vmatpush1.msra.mxu0 0.0
    %156 = vmatprep.subr.mxu0 0.0
    %157 = vmatpush1.msra.mxu0 0.0
    %158 = vmatprep.subr.mxu0 0.0
    %159 = vmatpush1.msra.mxu0 0.0
    %160 = vmatprep.subr.mxu0 0.0
    %161 = vmatpush1.msra.mxu0 0.0
    %162 = vmatprep.subr.mxu0 0.0
    %163 = vmatpush1.msra.mxu0 0.0
    %164 = vmatprep.subr.mxu0 0.0
    %165 = vmatpush1.msra.mxu0 0.0
    %166 = vmatprep.subr.mxu0 0.0
    %167 = vmatpush1.msra.mxu0 0.0
    %168 = vmatprep.subr.mxu0 0.0
    %169 = vmatpush1.msra.mxu0 0.0
    %170 = vmatprep.subr.mxu0 0.0
    %171 = vmatpush1.msra.mxu0 0.0
    %172 = vmatprep.subr.mxu0 0.0
    %173 = vmatpush1.msra.mxu0 0.0
    %174 = vmatprep.subr.mxu0 0.0
    %175 = vmatpush1.msra.mxu0 0.0
    %176 = vmatprep.subr.mxu0 0.0
    %177 = vmatpush1.msra.mxu0 0.0
    %178 = vmatprep.subr.mxu0 0.0
    %179 = vmatpush1.msra.mxu0 0.0
    %180 = vmatprep.subr.mxu0 0.0
    %181 = vmatpush1.msra.mxu0 0.0
    %182 = vmatprep.subr.mxu0 0.0
    %183 = vmatpush1.msra.mxu0 0.0
    %184 = vmatprep.subr.mxu0 0.0
    %185 = vmatpush1.msra.mxu0 0.0
    %186 = vmatprep.subr.mxu0 0.0
    %187 = vmatpush1.msra.mxu0 0.0
    %188 = vmatprep.subr.mxu0 0.0
    %189 = vmatpush1.msra.mxu0 0.0
    %190 = vmatprep.subr.mxu0 0.0
    %191 = vmatpush1.msra.mxu0 0.0
    %192 = vmatprep.subr.mxu0 0.0
    %193 = vmatpush1.msra.mxu0 0.0
    %194 = vmatprep.subr.mxu0 0.0
    %195 = vmatpush1.msra.mxu0 0.0
    %196 = vmatprep.subr.mxu0 0.0
    %197 = vmatpush1.msra.mxu0 0.0
    %198 = vmatprep.subr.mxu0 0.0
    %199 = vmatpush1.msra.mxu0 0.0
    %200 = vmatprep.mubr.f32.mxu0 0.0
    %201 = vmatmul.mubr.f32.gmra.mrb[0].mxu0 %v131
    %v202 = vpop.f32.mrb[0].mxu0
    %v203 = vadd.f32 %v127, %v202
    %v204 = vpop.f32.mrb[0].mxu0
    %205 = vmatprep.mubr.f32.mxu0 0.0
    %206 = vmatmul.mubr.f32.gmra.mrb[0].mxu0 %v134
    %v207 = vpop.f32.mrb[0].mxu0
    %v208 = vadd.f32 %v127, %v207
    %v209 = vpop.f32.mrb[0].mxu0
    %210 = vdwg.mxu0
    %v211 = vmax.f32 %v203, 0.0
    %v212 = vmax.f32 %v208, 0.0
    %v213 = vld [vmem:[#allocation10] sm:$0xff]
    %v214 = vld [vmem:[#allocation10 + $0x8] sm:$0xff]
    %v215 = vld [vmem:[#allocation10 + $0x10] sm:$0xff]
    %v216 = vld [vmem:[#allocation10 + $0x18] sm:$0xff]
    %v217 = vld [vmem:[#allocation10 + $0x20] sm:$0xff]
    %v218 = vld [vmem:[#allocation10 + $0x28] sm:$0xff]
    %v219 = vld [vmem:[#allocation10 + $0x30] sm:$0xff]
    %v220 = vld [vmem:[#allocation10 + $0x38] sm:$0xff]
    %v221 = vld [vmem:[%s6] sm:$0x1]
    %v223 = vlaneseq
    %v224 = vshrl.u32 %v223, 7
    %v225 = vsub.s32 0, %v224
    %v226 = vrot.slane %v221, %v225
    %v229 = vsel %vm129, %v211, 0
    %v232 = vsel %vm129, %v212, 0
    %234 = vmatprep.subr.mxu0 0.0
    %235 = vmatpush1.msra.mxu0 %v213
    %236 = vmatprep.subr.mxu0 0.0
    %237 = vmatpush1.msra.mxu0 %v214
    %238 = vmatprep.subr.mxu0 0.0
    %239 = vmatpush1.msra.mxu0 %v215
    %240 = vmatprep.subr.mxu0 0.0
    %241 = vmatpush1.msra.mxu0 %v216
    %242 = vmatprep.subr.mxu0 0.0
    %243 = vmatpush1.msra.mxu0 %v217
    %244 = vmatprep.subr.mxu0 0.0
    %245 = vmatpush1.msra.mxu0 %v218
    %246 = vmatprep.subr.mxu0 0.0
    %247 = vmatpush1.msra.mxu0 %v219
    %248 = vmatprep.subr.mxu0 0.0
    %249 = vmatpush1.msra.mxu0 %v220
    %250 = vmatprep.subr.mxu0 0.0
    %251 = vmatpush1.msra.mxu0 0.0
    %252 = vmatprep.subr.mxu0 0.0
    %253 = vmatpush1.msra.mxu0 0.0
    %254 = vmatprep.subr.mxu0 0.0
    %255 = vmatpush1.msra.mxu0 0.0
    %256 = vmatprep.subr.mxu0 0.0
    %257 = vmatpush1.msra.mxu0 0.0
    %258 = vmatprep.subr.mxu0 0.0
    %259 = vmatpush1.msra.mxu0 0.0
    %260 = vmatprep.subr.mxu0 0.0
    %261 = vmatpush1.msra.mxu0 0.0
    %262 = vmatprep.subr.mxu0 0.0
    %263 = vmatpush1.msra.mxu0 0.0
    %264 = vmatprep.subr.mxu0 0.0
    %265 = vmatpush1.msra.mxu0 0.0
    %266 = vmatprep.subr.mxu0 0.0
    %267 = vmatpush1.msra.mxu0 0.0
    %268 = vmatprep.subr.mxu0 0.0
    %269 = vmatpush1.msra.mxu0 0.0
    %270 = vmatprep.subr.mxu0 0.0
    %271 = vmatpush1.msra.mxu0 0.0
    %272 = vmatprep.subr.mxu0 0.0
    %273 = vmatpush1.msra.mxu0 0.0
    %274 = vmatprep.subr.mxu0 0.0
    %275 = vmatpush1.msra.mxu0 0.0
    %276 = vmatprep.subr.mxu0 0.0
    %277 = vmatpush1.msra.mxu0 0.0
    %278 = vmatprep.subr.mxu0 0.0
    %279 = vmatpush1.msra.mxu0 0.0
    %280 = vmatprep.subr.mxu0 0.0
    %281 = vmatpush1.msra.mxu0 0.0
    %282 = vmatprep.subr.mxu0 0.0
    %283 = vmatpush1.msra.mxu0 0.0
    %284 = vmatprep.subr.mxu0 0.0
    %285 = vmatpush1.msra.mxu0 0.0
    %286 = vmatprep.subr.mxu0 0.0
    %287 = vmatpush1.msra.mxu0 0.0
    %288 = vmatprep.subr.mxu0 0.0
    %289 = vmatpush1.msra.mxu0 0.0
    %290 = vmatprep.subr.mxu0 0.0
    %291 = vmatpush1.msra.mxu0 0.0
    %292 = vmatprep.subr.mxu0 0.0
    %293 = vmatpush1.msra.mxu0 0.0
    %294 = vmatprep.subr.mxu0 0.0
    %295 = vmatpush1.msra.mxu0 0.0
    %296 = vmatprep.subr.mxu0 0.0
    %297 = vmatpush1.msra.mxu0 0.0
    %298 = vmatprep.mubr.f32.mxu0 0.0
    %299 = vmatmul.mubr.f32.gmra.mrb[0].mxu0 %v229
    %v300 = vpop.f32.mrb[0].mxu0
    %v301 = vadd.f32 %v226, %v300
    %v302 = vpop.f32.mrb[0].mxu0
    %303 = vmatprep.mubr.f32.mxu0 0.0
    %304 = vmatmul.mubr.f32.gmra.mrb[0].mxu0 %v232
    %v305 = vpop.f32.mrb[0].mxu0
    %v306 = vadd.f32 %v226, %v305
    %v307 = vpop.f32.mrb[0].mxu0
    %308 = vdwg.mxu0
    %v309 = vld [vmem:[#allocation2] sm:$0x1]
    %v310 = vsel %vm129, %v301, 0.0
    %v311 = vrot.slane %v310, 4
    %v312 = vadd.f32 %v310, %v311
    %v313 = vrot.slane %v312, 2
    %v314 = vadd.f32 %v312, %v313
    %v315 = vrot.slane %v314, 1
    %v316 = vadd.f32 %v314, %v315
    %v317 = vadd.f32 %v309, %v316
    %vm318 = vcmask 516096
    %319 = vst.msk [vmem:[#allocation2] sm:$0x1] %vm318, %v317
    %v320 = vld [vmem:[#allocation2 + $0x1] sm:$0x1]
    %v321 = vsel %vm129, %v306, 0.0
    %v322 = vrot.slane %v321, 4
    %v323 = vadd.f32 %v321, %v322
    %v324 = vrot.slane %v323, 2
    %v325 = vadd.f32 %v323, %v324
    %v326 = vrot.slane %v325, 1
    %v327 = vadd.f32 %v325, %v326
    %v328 = vadd.f32 %v320, %v327
    %329 = vst.msk [vmem:[#allocation2 + $0x1] sm:$0x1] %vm318, %v328
    // Predicated region
    $region66: #{tpu_custom_call.1} parent=1 // pred_check
      %p330 = pneg %p106
    $region67: #{tpu_custom_call.1} parent=1 // pred_check_branch
      %332 = sbr.rel (%p330) target = $region69
    $region68: #{tpu_custom_call.1} parent=1 // pred_region
      %v333 = vld [vmem:[#allocation2] sm:$0x3]
      %v334 = vmul.f32 %v333, 0.125
      %v335 = vld [vmem:[#allocation11] sm:$0xff]
      %v336 = vld [vmem:[#allocation11 + $0x8] sm:$0xff]
      %v337 = vld [vmem:[#allocation11 + $0x10] sm:$0xff]
      %v338 = vld [vmem:[#allocation11 + $0x18] sm:$0xff]
      %v339 = vld [vmem:[#allocation11 + $0x20] sm:$0xff]
      %v340 = vld [vmem:[#allocation11 + $0x28] sm:$0xff]
      %v341 = vld [vmem:[#allocation11 + $0x30] sm:$0xff]
      %v342 = vld [vmem:[#allocation11 + $0x38] sm:$0xff]
      %v343 = vld [vmem:[%s8] sm:$0x1]
      %v345 = vlaneseq
      %v346 = vshrl.u32 %v345, 7
      %v347 = vsub.s32 0, %v346
      %v348 = vrot.slane %v343, %v347
      %v351 = vsel %vm129, %v334, 0
      %353 = vmatprep.subr.mxu0 0.0
      %354 = vmatpush1.msra.mxu0 %v335
      %355 = vmatprep.subr.mxu0 0.0
      %356 = vmatpush1.msra.mxu0 %v336
      %357 = vmatprep.subr.mxu0 0.0
      %358 = vmatpush1.msra.mxu0 %v337
      %359 = vmatprep.subr.mxu0 0.0
      %360 = vmatpush1.msra.mxu0 %v338
      %361 = vmatprep.subr.mxu0 0.0
      %362 = vmatpush1.msra.mxu0 %v339
      %363 = vmatprep.subr.mxu0 0.0
      %364 = vmatpush1.msra.mxu0 %v340
      %365 = vmatprep.subr.mxu0 0.0
      %366 = vmatpush1.msra.mxu0 %v341
      %367 = vmatprep.subr.mxu0 0.0
      %368 = vmatpush1.msra.mxu0 %v342
      %369 = vmatprep.subr.mxu0 0.0
      %370 = vmatpush1.msra.mxu0 0.0
      %371 = vmatprep.subr.mxu0 0.0
      %372 = vmatpush1.msra.mxu0 0.0
      %373 = vmatprep.subr.mxu0 0.0
      %374 = vmatpush1.msra.mxu0 0.0
      %375 = vmatprep.subr.mxu0 0.0
      %376 = vmatpush1.msra.mxu0 0.0
      %377 = vmatprep.subr.mxu0 0.0
      %378 = vmatpush1.msra.mxu0 0.0
      %379 = vmatprep.subr.mxu0 0.0
      %380 = vmatpush1.msra.mxu0 0.0
      %381 = vmatprep.subr.mxu0 0.0
      %382 = vmatpush1.msra.mxu0 0.0
      %383 = vmatprep.subr.mxu0 0.0
      %384 = vmatpush1.msra.mxu0 0.0
      %385 = vmatprep.subr.mxu0 0.0
      %386 = vmatpush1.msra.mxu0 0.0
      %387 = vmatprep.subr.mxu0 0.0
      %388 = vmatpush1.msra.mxu0 0.0
      %389 = vmatprep.subr.mxu0 0.0
      %390 = vmatpush1.msra.mxu0 0.0
      %391 = vmatprep.subr.mxu0 0.0
      %392 = vmatpush1.msra.mxu0 0.0
      %393 = vmatprep.subr.mxu0 0.0
      %394 = vmatpush1.msra.mxu0 0.0
      %395 = vmatprep.subr.mxu0 0.0
      %396 = vmatpush1.msra.mxu0 0.0
      %397 = vmatprep.subr.mxu0 0.0
      %398 = vmatpush1.msra.mxu0 0.0
      %399 = vmatprep.subr.mxu0 0.0
      %400 = vmatpush1.msra.mxu0 0.0
      %401 = vmatprep.subr.mxu0 0.0
      %402 = vmatpush1.msra.mxu0 0.0
      %403 = vmatprep.subr.mxu0 0.0
      %404 = vmatpush1.msra.mxu0 0.0
      %405 = vmatprep.subr.mxu0 0.0
      %406 = vmatpush1.msra.mxu0 0.0
      %407 = vmatprep.subr.mxu0 0.0
      %408 = vmatpush1.msra.mxu0 0.0
      %409 = vmatprep.subr.mxu0 0.0
      %410 = vmatpush1.msra.mxu0 0.0
      %411 = vmatprep.subr.mxu0 0.0
      %412 = vmatpush1.msra.mxu0 0.0
      %413 = vmatprep.subr.mxu0 0.0
      %414 = vmatpush1.msra.mxu0 0.0
      %415 = vmatprep.subr.mxu0 0.0
      %416 = vmatpush1.msra.mxu0 0.0
      %417 = vmatprep.mubr.f32.mxu0 0.0
      %418 = vmatmul.mubr.f32.gmra.mrb[0].mxu0 %v351
      %v419 = vpop.f32.mrb[0].mxu0
      %v420 = vadd.f32 %v348, %v419
      %v421 = vpop.f32.mrb[0].mxu0
      %422 = vdwg.mxu0
      %v423 = vmax.f32 %v420, 0.0
      %v424 = vld [vmem:[#allocation13] sm:$0xff]
      %v425 = vld [vmem:[#allocation13 + $0x8] sm:$0xff]
      %v426 = vld [vmem:[#allocation13 + $0x10] sm:$0xff]
      %v427 = vld [vmem:[#allocation13 + $0x18] sm:$0xff]
      %v428 = vld [vmem:[#allocation13 + $0x20] sm:$0xff]
      %v429 = vld [vmem:[#allocation13 + $0x28] sm:$0xff]
      %v430 = vld [vmem:[#allocation13 + $0x30] sm:$0xff]
      %v431 = vld [vmem:[#allocation13 + $0x38] sm:$0xff]
      %v432 = vld [vmem:[%s10] sm:$0x1]
      %v434 = vlaneseq
      %v435 = vshrl.u32 %v434, 7
      %v436 = vsub.s32 0, %v435
      %v437 = vrot.slane %v432, %v436
      %v440 = vsel %vm129, %v423, 0
      %442 = vmatprep.subr.mxu0 0.0
      %443 = vmatpush1.msra.mxu0 %v424
      %444 = vmatprep.subr.mxu0 0.0
      %445 = vmatpush1.msra.mxu0 %v425
      %446 = vmatprep.subr.mxu0 0.0
      %447 = vmatpush1.msra.mxu0 %v426
      %448 = vmatprep.subr.mxu0 0.0
      %449 = vmatpush1.msra.mxu0 %v427
      %450 = vmatprep.subr.mxu0 0.0
      %451 = vmatpush1.msra.mxu0 %v428
      %452 = vmatprep.subr.mxu0 0.0
      %453 = vmatpush1.msra.mxu0 %v429
      %454 = vmatprep.subr.mxu0 0.0
      %455 = vmatpush1.msra.mxu0 %v430
      %456 = vmatprep.subr.mxu0 0.0
      %457 = vmatpush1.msra.mxu0 %v431
      %458 = vmatprep.subr.mxu0 0.0
      %459 = vmatpush1.msra.mxu0 0.0
      %460 = vmatprep.subr.mxu0 0.0
      %461 = vmatpush1.msra.mxu0 0.0
      %462 = vmatprep.subr.mxu0 0.0
      %463 = vmatpush1.msra.mxu0 0.0
      %464 = vmatprep.subr.mxu0 0.0
      %465 = vmatpush1.msra.mxu0 0.0
      %466 = vmatprep.subr.mxu0 0.0
      %467 = vmatpush1.msra.mxu0 0.0
      %468 = vmatprep.subr.mxu0 0.0
      %469 = vmatpush1.msra.mxu0 0.0
      %470 = vmatprep.subr.mxu0 0.0
      %471 = vmatpush1.msra.mxu0 0.0
      %472 = vmatprep.subr.mxu0 0.0
      %473 = vmatpush1.msra.mxu0 0.0
      %474 = vmatprep.subr.mxu0 0.0
      %475 = vmatpush1.msra.mxu0 0.0
      %476 = vmatprep.subr.mxu0 0.0
      %477 = vmatpush1.msra.mxu0 0.0
      %478 = vmatprep.subr.mxu0 0.0
      %479 = vmatpush1.msra.mxu0 0.0
      %480 = vmatprep.subr.mxu0 0.0
      %481 = vmatpush1.msra.mxu0 0.0
      %482 = vmatprep.subr.mxu0 0.0
      %483 = vmatpush1.msra.mxu0 0.0
      %484 = vmatprep.subr.mxu0 0.0
      %485 = vmatpush1.msra.mxu0 0.0
      %486 = vmatprep.subr.mxu0 0.0
      %487 = vmatpush1.msra.mxu0 0.0
      %488 = vmatprep.subr.mxu0 0.0
      %489 = vmatpush1.msra.mxu0 0.0
      %490 = vmatprep.subr.mxu0 0.0
      %491 = vmatpush1.msra.mxu0 0.0
      %492 = vmatprep.subr.mxu0 0.0
      %493 = vmatpush1.msra.mxu0 0.0
      %494 = vmatprep.subr.mxu0 0.0
      %495 = vmatpush1.msra.mxu0 0.0
      %496 = vmatprep.subr.mxu0 0.0
      %497 = vmatpush1.msra.mxu0 0.0
      %498 = vmatprep.subr.mxu0 0.0
      %499 = vmatpush1.msra.mxu0 0.0
      %500 = vmatprep.subr.mxu0 0.0
      %501 = vmatpush1.msra.mxu0 0.0
      %502 = vmatprep.subr.mxu0 0.0
      %503 = vmatpush1.msra.mxu0 0.0
      %504 = vmatprep.subr.mxu0 0.0
      %505 = vmatpush1.msra.mxu0 0.0
      %506 = vmatprep.mubr.f32.mxu0 0.0
      %507 = vmatmul.mubr.f32.gmra.mrb[0].mxu0 %v440
      %v508 = vpop.f32.mrb[0].mxu0
      %v509 = vadd.f32 %v437, %v508
      %v510 = vpop.f32.mrb[0].mxu0
      %511 = vdwg.mxu0
      %v512 = vld [vmem:[%s2] sm:$0x3]
      %v513 = vmul.f32 %v509, 0.5
      %v514 = vmul.f32 %v513, 1.442695
      %v515 = vpow.pop %v514
      %517 = vrot.lane.b32.xlu0 %v515, 64
      %v518 = vpop.permute.xlu0 %517
      %v520 = vmul.f32 %v512, %v518
      %v521 = vadd.f32 %v520, %v509
      %vm522 = vcmask 517120
      %523 = vst.msk [vmem:[#allocation14] sm:$0x3] %vm522, %v521
    $region69: #{tpu_custom_call.1} parent=1 // pred_fallthru
      _
    // Predicated region
    $region70: #{tpu_custom_call.1} parent=1 // pred_check
      _
    $region71: #{tpu_custom_call.1} parent=1 // pred_check_branch
      %525 = sbr.rel (0) target = $region73
    $region72: #{tpu_custom_call.1} parent=1 // pred_region
      %s527 = ssub.s32 32, 32
      %528 = vsyncadd [#allocation7], %s527
      %s530 = sshll.u32 [#allocation14], 4
      %s531 = int_to_ptr.vmem [resolvable:$true] %s530
      %533 = dma.vmem_to_hbm [thread:$0]  %s531, 32, %s11, [#allocation7]
    $region73: #{tpu_custom_call.1} parent=1 // pred_fallthru
      _
    // Predicated region
    $region74: #{tpu_custom_call.1} parent=1 // pred_check
      _
    $region75: #{tpu_custom_call.1} parent=1 // pred_check_branch
      %535 = sbr.rel (0) target = $region77
    $region76: #{tpu_custom_call.1} parent=1 // pred_region
      %536 = dma.done [#allocation7], 32
    $region77: #{tpu_custom_call.1} parent=1 // pred_fallthru
      _
    %537 = vsyncpa [#allocation6], 1
    %538 = vsyncpa [#allocation9], 1
    %539 = vsyncpa [#allocation12], 1
    %540 = vsyncpa [#allocation7], 1

</llo_original>
